<compile_context>
chip_gen: v6e
topology: v6e:2x2x1
jax: 0.10.0
libtpu: 0.0.40
codegen_flags: <defaults>
</compile_context>

<pallas_src>
import math
import functools

import jax
import jax.numpy as jnp
from jax.experimental import pallas as pl
from jax.experimental.pallas import tpu as pltpu

LN_EPS = 1e-5  # PyTorch nn.LayerNorm default


def _round_up(x, m):
    return ((x + m - 1) // m) * m


def _cdiv(a, b):
    return (a + b - 1) // b


def _vmem_capacity_bytes():
    """Per-TensorCore VMEM capacity; conservative (v7x) fallback if unavailable."""
    try:
        info = pltpu.get_tpu_info()
        cap = getattr(info, "vmem_capacity_bytes", None)
        if cap:
            return int(cap)
    except Exception:
        pass
    return 64 << 20


def _resblock_kernel(x_ref, w_ref, b_ref, g_ref, beta_ref, o_ref, *, out_dim, has_proj):
    # x_ref:    (TM, K)                row tile (native dtype; K = in_dim, or n_pad for identity)
    # w_ref:    (K, 2*N_pad) | (K, N_pad)  [W_lin^T | W_proj^T] or just W_lin^T (zero lane-padded)
    # b_ref:    (1, 2*N_pad) | (1, N_pad)
    # g_ref:    (1, N_pad)             LayerNorm gamma (zero-padded)
    # beta_ref: (1, N_pad)             LayerNorm beta  (zero-padded)
    # o_ref:    (TM, N_pad)
    n_pad = o_ref.shape[-1]

    xv = x_ref[...]
    # One MXU pass covering the linear branch (and the projection residual when present).
    # Operands stay in native dtype; accumulate in f32.
    y2 = jnp.dot(xv, w_ref[...], preferred_element_type=jnp.float32)
    y2 = y2 + b_ref[...].astype(jnp.float32)

    if has_proj:
        h = y2[:, :n_pad]              # linear branch (lane-aligned split)
        r = y2[:, n_pad:]              # projection residual
    else:
        h = y2
        r = xv.astype(jnp.float32)     # identity residual (x is lane-padded with zeros if needed)

    # GELU -- exact (erf) form, matching nn.GELU() default.
    h = 0.5 * h * (1.0 + jax.lax.erf(h * (1.0 / math.sqrt(2.0))))

    # Dropout(rate=0.0) == Identity (module default / eval semantics); nothing to do.
    # TODO(synk): training-mode dropout (rate > 0) would need pltpu.prng_* masking here.

    y = h + r

    # LayerNorm over the REAL out_dim columns. Padded columns of y are exactly zero
    # (zero-padded weight/bias columns, GELU(0)==0, zero-padded residual), so the
    # unmasked sums are correct: no select/mask pass needed.
    inv_n = 1.0 / out_dim
    mean = jnp.sum(y, axis=-1, keepdims=True) * inv_n
    var = jnp.maximum(jnp.sum(y * y, axis=-1, keepdims=True) * inv_n - mean * mean, 0.0)
    out = (y - mean) * jax.lax.rsqrt(var + LN_EPS) * g_ref[...].astype(jnp.float32) \
          + beta_ref[...].astype(jnp.float32)

    o_ref[...] = out.astype(o_ref.dtype)


def prepare_resblock_params(w_lin, b_lin, w_proj=None, b_proj=None, gamma=None, beta=None,
                            dot_dtype=None):
    """Fuse/pad the layer parameters ONCE per layer (hoisted out of the per-call path).

    w_lin/w_proj are PyTorch-layout (out_dim, in_dim). Pass w_proj=None for the identity
    residual (in_dim == out_dim). Optionally cast the matmul operand to `dot_dtype`
    (e.g. jnp.bfloat16) for the fast MXU path — keep x the same dtype in that case.
    """
    out_dim, in_dim = w_lin.shape
    has_proj = w_proj is not None
    if not has_proj:
        assert in_dim == out_dim, "identity residual requires in_dim == out_dim"
    n_pad = _round_up(out_dim, 128)

    def pad_lanes(a):  # pad last dim to n_pad with zeros
        return a if a.shape[-1] == n_pad else jnp.pad(a, ((0, 0), (0, n_pad - a.shape[-1])))

    if gamma is None:
        gamma = jnp.ones((out_dim,), jnp.float32)
    if beta is None:
        beta = jnp.zeros((out_dim,), jnp.float32)

    if has_proj:
        # One (in_dim, 2*n_pad) slab -> single MXU matmul per tile, lane-aligned split.
        w_fused = jnp.concatenate([pad_lanes(w_lin.T), pad_lanes(w_proj.T)], axis=1)
        b_fused = jnp.concatenate(
            [pad_lanes(b_lin.reshape(1, -1).astype(jnp.float32)),
             pad_lanes(b_proj.reshape(1, -1).astype(jnp.float32))], axis=1)
    else:
        # Identity residual: no projection matmul at all. If out_dim is not lane-aligned,
        # pad the contraction rows so x can be zero-padded to n_pad columns and reused as
        # the residual inside the kernel.
        k_dim = in_dim if n_pad == in_dim else n_pad
        wt = pad_lanes(w_lin.T)
        if k_dim != in_dim:
            wt = jnp.pad(wt, ((0, k_dim - in_dim), (0, 0)))
        w_fused = wt
        b_fused = pad_lanes(b_lin.reshape(1, -1).astype(jnp.float32))

    if dot_dtype is not None:
        w_fused = w_fused.astype(dot_dtype)

    return dict(
        w_fused=w_fused,
        b_fused=b_fused,
        gamma=pad_lanes(gamma.reshape(1, -1).astype(jnp.float32)),
        beta=pad_lanes(beta.reshape(1, -1).astype(jnp.float32)),
        out_dim=int(out_dim),
        has_proj=bool(has_proj),
    )


@functools.partial(jax.jit, static_argnames=("out_dim", "has_proj", "tm", "single_buffer_consts"))
def _residual_block_impl(x, w_fused, b_fused, gamma, beta, *, out_dim, has_proj, tm,
                         single_buffer_consts):
    batch, seq, in_dim = x.shape
    M = batch * seq
    k_dim, w_cols = w_fused.shape
    n_pad = w_cols // 2 if has_proj else w_cols
    out_dtype = x.dtype

    x2 = x.reshape(M, in_dim)
    if x2.dtype != w_fused.dtype:
        x2 = x2.astype(w_fused.dtype)   # keep MXU operand dtypes consistent (no silent f32 path)

    # ---- row-tile selection: generation-aware VMEM budget, then minimal row padding ----
    cap = _vmem_capacity_bytes()
    budget = min(int(cap * 0.78), cap - (12 << 20))     # ~50 MiB on v7x, ~100 MiB on v5e/v6e
    x_it = x2.dtype.itemsize
    w_it = w_fused.dtype.itemsize
    o_it = jnp.dtype(out_dtype).itemsize
    w_bufs = 1 if single_buffer_consts else 2
    const_bytes = w_bufs * k_dim * w_cols * w_it + 8 * (w_cols + 2 * n_pad) * 4
    per_row = (2 * k_dim * x_it              # x tile, double-buffered
               + 2 * n_pad * o_it            # out tile, double-buffered
               + (w_cols + 3 * n_pad) * 4)   # f32 dot result + h/y/out temporaries
    tm_c = max(8, _round_up(tm, 8))
    while tm_c > 128 and const_bytes + tm_c * per_row > budget:
        tm_c = max(128, _round_up(tm_c // 2, 8))
    need = const_bytes + tm_c * per_row

    n_tiles = _cdiv(M, tm_c)
    tm_eff = max(8, _round_up(_cdiv(M, n_tiles), 8))    # minimize dead rows for small/odd M
    m_pad = tm_eff * n_tiles

    pad_rows = m_pad - M
    pad_feat = k_dim - in_dim                           # >0 only for identity + unaligned out_dim
    if pad_rows or pad_feat:
        x2 = jnp.pad(x2, ((0, pad_rows), (0, pad_feat)))

    vmem_limit = int(min(max(budget, int(need * 1.25)), cap - (2 << 20)))

    cost = pl.CostEstimate(
        flops=2 * m_pad * k_dim * w_cols,
        transcendentals=m_pad * n_pad,
        bytes_accessed=(m_pad * k_dim * x_it + k_dim * w_cols * w_it
                        + m_pad * n_pad * o_it + 8 * (w_cols + 2 * n_pad)),
    )

    if single_buffer_consts:
        def const_spec(shape):  # grid-constant blocks: no double-buffering
            return pl.BlockSpec(shape, lambda i: (0, 0), pipeline_mode=pl.Buffered(1))
    else:
        def const_spec(shape):
            return pl.BlockSpec(shape, lambda i: (0, 0))

    out2 = pl.pallas_call(
        functools.partial(_resblock_kernel, out_dim=out_dim, has_proj=has_proj),
        out_shape=jax.ShapeDtypeStruct((m_pad, n_pad), out_dtype),
        grid_spec=pltpu.PrefetchScalarGridSpec(
            num_scalar_prefetch=0,
            grid=(n_tiles,),
            in_specs=[
                pl.BlockSpec((tm_eff, k_dim), lambda i: (i, 0)),   # x tile (streamed)
                const_spec((k_dim, w_cols)),                       # fused W^T (resident)
                const_spec((1, w_cols)),                           # fused bias
                const_spec((1, n_pad)),                            # gamma
                const_spec((1, n_pad)),                            # beta
            ],
            out_specs=pl.BlockSpec((tm_eff, n_pad), lambda i: (i, 0)),
        ),
        compiler_params=pltpu.CompilerParams(
            dimension_semantics=("parallel",),
            vmem_limit_bytes=vmem_limit,
        ),
        cost_estimate=cost,
    )(x2, w_fused, b_fused, gamma, beta)

    if m_pad != M or n_pad != out_dim:
        out2 = out2[:M, :out_dim]
    return out2.reshape(batch, seq, out_dim)


def residual_block_apply(x, params, *, tm=1024):
    """Apply a prepared ResidualBlock to x of shape (batch, seq, in_dim)."""
    kw = dict(out_dim=params["out_dim"], has_proj=params["has_proj"], tm=tm)
    try:
        return _residual_block_impl(x, params["w_fused"], params["b_fused"],
                                    params["gamma"], params["beta"],
                                    single_buffer_consts=True, **kw)
    except Exception:
        # Fallback if this Pallas build rejects single-buffered (Buffered(1)) constant specs.
        return _residual_block_impl(x, params["w_fused"], params["b_fused"],
                                    params["gamma"], params["beta"],
                                    single_buffer_consts=False, **kw)


def residual_block(x, w_lin, b_lin, w_proj=None, b_proj=None, gamma=None, beta=None, *, tm=1024):
    # One-shot convenience path; prefer prepare_resblock_params + residual_block_apply so the
    # weight fusion/padding HBM passes happen once per layer, not per forward call.
    params = prepare_resblock_params(w_lin, b_lin, w_proj, b_proj, gamma, beta)
    return residual_block_apply(x, params, tm=tm)


def _reference(x, w_lin, b_lin, w_proj=None, b_proj=None, gamma=None, beta=None):
    residual = x if w_proj is None else x @ w_proj.T + b_proj
    out = x @ w_lin.T + b_lin
    out = 0.5 * out * (1.0 + jax.lax.erf(out / math.sqrt(2.0)))
    y = out + residual
    mean = jnp.mean(y, axis=-1, keepdims=True)
    var = jnp.mean((y - mean) ** 2, axis=-1, keepdims=True)
    out = (y - mean) * jax.lax.rsqrt(var + LN_EPS)
    return out * gamma + beta


if __name__ == "__main__":
    key = jax.random.PRNGKey(0)
    k = jax.random.split(key, 8)

    # ---- case 1: in_dim != out_dim -> Linear projection residual ----
    batch, seq, in_dim, out_dim = 2, 8, 32, 64
    x = jax.random.normal(k[0], (batch, seq, in_dim), dtype=jnp.float32)
    lim = 1.0 / math.sqrt(in_dim)
    w_lin = jax.random.uniform(k[1], (out_dim, in_dim), minval=-lim, maxval=lim)
    b_lin = jax.random.uniform(k[2], (out_dim,), minval=-lim, maxval=lim)
    w_proj = jax.random.uniform(k[3], (out_dim, in_dim), minval=-lim, maxval=lim)
    b_proj = jax.random.uniform(k[4], (out_dim,), minval=-lim, maxval=lim)
    gamma = jnp.ones((out_dim,), dtype=jnp.float32)   # nn.LayerNorm init
    beta = jnp.zeros((out_dim,), dtype=jnp.float32)

    params = prepare_resblock_params(w_lin, b_lin, w_proj, b_proj, gamma, beta)
    out = jax.block_until_ready(residual_block_apply(x, params))
    ref = _reference(x, w_lin, b_lin, w_proj, b_proj, gamma, beta)
    assert out.shape == (batch, seq, out_dim)
    assert jnp.allclose(out, ref, atol=1e-5, rtol=1e-5), "mismatch vs reference (projection)"

    # ragged M (tail-row handling)
    xb = jax.random.normal(k[5], (3, 37, in_dim), dtype=jnp.float32)
    outb = jax.block_until_ready(residual_block_apply(xb, params))
    refb = _reference(xb, w_lin, b_lin, w_proj, b_proj, gamma, beta)
    assert jnp.allclose(outb, refb, atol=1e-5, rtol=1e-5), "mismatch vs reference (ragged M)"

    # ---- case 2: in_dim == out_dim -> identity residual (projection matmul skipped) ----
    dim = 64
    x3 = jax.random.normal(k[6], (2, 9, dim), dtype=jnp.float32)
    lim2 = 1.0 / math.sqrt(dim)
    w2 = jax.random.uniform(k[7], (dim, dim), minval=-lim2, maxval=lim2)
    b2 = jax.random.uniform(k[2], (dim,), minval=-lim2, maxval=lim2)
    g2 = jnp.ones((dim,), jnp.float32)
    bt2 = jnp.zeros((dim,), jnp.float32)
    params2 = prepare_resblock_params(w2, b2, None, None, g2, bt2)
    out3 = jax.block_until_ready(residual_block_apply(x3, params2))
    ref3 = _reference(x3, w2, b2, None, None, g2, bt2)
    assert jnp.allclose(out3, ref3, atol=1e-5, rtol=1e-5), "mismatch vs reference (identity)"

    print("KERNEL_OK")
</pallas_src>

<mosaic_0001>
module attributes {stable_mosaic.version = 11 : i64} {
  func.func @_resblock_kernel(%arg0: i32, %arg1: memref<16x32xf32, #tpu.memory_space<vmem>>, %arg2: memref<32x256xf32, #tpu.memory_space<vmem>>, %arg3: memref<1x256xf32, #tpu.memory_space<vmem>>, %arg4: memref<1x128xf32, #tpu.memory_space<vmem>>, %arg5: memref<1x128xf32, #tpu.memory_space<vmem>>, %arg6: memref<16x128xf32, #tpu.memory_space<vmem>>) attributes {dimension_semantics = [#tpu.dimension_semantics<parallel>], iteration_bounds = array<i64: 1>, scalar_prefetch = 0 : i64, scratch_operands = 0 : i64, tpu.core_type = #tpu.core_type<tc>, window_params = [{transform_indices = @transform_0, window_bounds = array<i64: 16, 32>}, {pipeline_mode = #tpu.pipeline_mode<synchronous>, transform_indices = @transform_1, window_bounds = array<i64: 32, 256>}, {pipeline_mode = #tpu.pipeline_mode<synchronous>, transform_indices = @transform_2, window_bounds = array<i64: 1, 256>}, {pipeline_mode = #tpu.pipeline_mode<synchronous>, transform_indices = @transform_3, window_bounds = array<i64: 1, 128>}, {pipeline_mode = #tpu.pipeline_mode<synchronous>, transform_indices = @transform_4, window_bounds = array<i64: 1, 128>}, {transform_indices = @transform_5, window_bounds = array<i64: 16, 128>}]} {
    %c0 = arith.constant 0 : index
    %c0_0 = arith.constant 0 : index
    %0 = vector.load %arg1[%c0, %c0_0] : memref<16x32xf32, #tpu.memory_space<vmem>>, vector<16x32xf32>
    %c0_1 = arith.constant 0 : index
    %c0_2 = arith.constant 0 : index
    %1 = vector.load %arg2[%c0_1, %c0_2] : memref<32x256xf32, #tpu.memory_space<vmem>>, vector<32x256xf32>
    %cst = arith.constant dense<0.000000e+00> : vector<16x256xf32>
    %2 = tpu.matmul %0, %1, %cst {dimension_numbers = #tpu.dot_dimension_numbers<[1], [0], [0], [1], [0, 0, 1, 1], [], []>} : vector<16x32xf32>, vector<32x256xf32>, vector<16x256xf32> -> vector<16x256xf32>
    %c0_3 = arith.constant 0 : index
    %c0_4 = arith.constant 0 : index
    %3 = vector.load %arg3[%c0_3, %c0_4] : memref<1x256xf32, #tpu.memory_space<vmem>>, vector<1x256xf32>
    %4 = vector.broadcast %3 : vector<1x256xf32> to vector<16x256xf32>
    %5 = arith.addf %2, %4 : vector<16x256xf32>
    %6 = vector.extract_strided_slice %5 {offsets = [0, 0], sizes = [16, 128], strides = [1, 1]} : vector<16x256xf32> to vector<16x128xf32>
    %7 = vector.extract_strided_slice %5 {offsets = [0, 128], sizes = [16, 128], strides = [1, 1]} : vector<16x256xf32> to vector<16x128xf32>
    %cst_5 = arith.constant 5.000000e-01 : f32
    %8 = vector.broadcast %cst_5 : f32 to vector<16x128xf32>
    %9 = arith.mulf %8, %6 : vector<16x128xf32>
    %cst_6 = arith.constant 0.707106769 : f32
    %10 = vector.broadcast %cst_6 : f32 to vector<16x128xf32>
    %11 = arith.mulf %6, %10 : vector<16x128xf32>
    %12 = math.erf %11 : vector<16x128xf32>
    %cst_7 = arith.constant 1.000000e+00 : f32
    %13 = vector.broadcast %cst_7 : f32 to vector<16x128xf32>
    %14 = arith.addf %13, %12 : vector<16x128xf32>
    %15 = arith.mulf %9, %14 : vector<16x128xf32>
    %16 = arith.addf %15, %7 : vector<16x128xf32>
    %cst_8 = arith.constant dense<0.000000e+00> : vector<16xf32>
    %17 = vector.multi_reduction <add>, %16, %cst_8 [1] : vector<16x128xf32> to vector<16xf32>
    %18 = vector.shape_cast %17 : vector<16xf32> to vector<16x1xf32>
    %cst_9 = arith.constant 1.562500e-02 : f32
    %19 = vector.broadcast %cst_9 : f32 to vector<16x1xf32>
    %20 = arith.mulf %18, %19 : vector<16x1xf32>
    %21 = arith.mulf %16, %16 : vector<16x128xf32>
    %cst_10 = arith.constant dense<0.000000e+00> : vector<16xf32>
    %22 = vector.multi_reduction <add>, %21, %cst_10 [1] : vector<16x128xf32> to vector<16xf32>
    %23 = vector.shape_cast %22 : vector<16xf32> to vector<16x1xf32>
    %cst_11 = arith.constant 1.562500e-02 : f32
    %24 = vector.broadcast %cst_11 : f32 to vector<16x1xf32>
    %25 = arith.mulf %23, %24 : vector<16x1xf32>
    %26 = arith.mulf %20, %20 : vector<16x1xf32>
    %27 = arith.subf %25, %26 : vector<16x1xf32>
    %cst_12 = arith.constant 0.000000e+00 : f32
    %28 = vector.broadcast %cst_12 : f32 to vector<16x1xf32>
    %29 = arith.maximumf %27, %28 : vector<16x1xf32>
    %30 = vector.broadcast %20 : vector<16x1xf32> to vector<16x128xf32>
    %31 = arith.subf %16, %30 : vector<16x128xf32>
    %cst_13 = arith.constant 9.99999974E-6 : f32
    %32 = vector.broadcast %cst_13 : f32 to vector<16x1xf32>
    %33 = arith.addf %29, %32 : vector<16x1xf32>
    %34 = math.rsqrt %33 : vector<16x1xf32>
    %35 = vector.broadcast %34 : vector<16x1xf32> to vector<16x128xf32>
    %36 = arith.mulf %31, %35 : vector<16x128xf32>
    %c0_14 = arith.constant 0 : index
    %c0_15 = arith.constant 0 : index
    %37 = vector.load %arg4[%c0_14, %c0_15] : memref<1x128xf32, #tpu.memory_space<vmem>>, vector<1x128xf32>
    %38 = vector.broadcast %37 : vector<1x128xf32> to vector<16x128xf32>
    %39 = arith.mulf %36, %38 : vector<16x128xf32>
    %c0_16 = arith.constant 0 : index
    %c0_17 = arith.constant 0 : index
    %40 = vector.load %arg5[%c0_16, %c0_17] : memref<1x128xf32, #tpu.memory_space<vmem>>, vector<1x128xf32>
    %41 = vector.broadcast %40 : vector<1x128xf32> to vector<16x128xf32>
    %42 = arith.addf %39, %41 : vector<16x128xf32>
    %c0_18 = arith.constant 0 : index
    %c0_19 = arith.constant 0 : index
    %43 = vector.load %arg6[%c0_18, %c0_19] : memref<16x128xf32, #tpu.memory_space<vmem>>, vector<16x128xf32>
    tpu.vector_store %arg6[%c0_18, %c0_19], %42 {strides = array<i32>} : memref<16x128xf32, #tpu.memory_space<vmem>>, vector<16x128xf32>,
    return
  }
  func.func @transform_0(%arg0: i32) -> (i32, i32) {
    %c0_i32 = arith.constant 0 : i32
    %c0_i32_0 = arith.constant 0 : i32
    return %arg0, %c0_i32 : i32, i32
  }
  func.func @transform_1(%arg0: i32) -> (i32, i32) {
    %c0_i32 = arith.constant 0 : i32
    %c0_i32_0 = arith.constant 0 : i32
    %c0_i32_1 = arith.constant 0 : i32
    return %c0_i32, %c0_i32_0 : i32, i32
  }
  func.func @transform_2(%arg0: i32) -> (i32, i32) {
    %c0_i32 = arith.constant 0 : i32
    %c0_i32_0 = arith.constant 0 : i32
    %c0_i32_1 = arith.constant 0 : i32
    return %c0_i32, %c0_i32_0 : i32, i32
  }
  func.func @transform_3(%arg0: i32) -> (i32, i32) {
    %c0_i32 = arith.constant 0 : i32
    %c0_i32_0 = arith.constant 0 : i32
    %c0_i32_1 = arith.constant 0 : i32
    return %c0_i32, %c0_i32_0 : i32, i32
  }
  func.func @transform_4(%arg0: i32) -> (i32, i32) {
    %c0_i32 = arith.constant 0 : i32
    %c0_i32_0 = arith.constant 0 : i32
    %c0_i32_1 = arith.constant 0 : i32
    return %c0_i32, %c0_i32_0 : i32, i32
  }
  func.func @transform_5(%arg0: i32) -> (i32, i32) {
    %c0_i32 = arith.constant 0 : i32
    %c0_i32_0 = arith.constant 0 : i32
    return %arg0, %c0_i32 : i32, i32
  }
}

module attributes {stable_mosaic.version = 11 : i64} {
  func.func @_resblock_kernel(%arg0: i32, %arg1: memref<16x32xf32, #tpu.memory_space<vmem>>, %arg2: memref<32x256xf32, #tpu.memory_space<vmem>>, %arg3: memref<1x256xf32, #tpu.memory_space<vmem>>, %arg4: memref<1x128xf32, #tpu.memory_space<vmem>>, %arg5: memref<1x128xf32, #tpu.memory_space<vmem>>, %arg6: memref<16x128xf32, #tpu.memory_space<vmem>>) attributes {dimension_semantics = [#tpu.dimension_semantics<parallel>], iteration_bounds = array<i64: 1>, scalar_prefetch = 0 : i64, scratch_operands = 0 : i64, tpu.core_type = #tpu.core_type<tc>, window_params = [{transform_indices = @transform_0, window_bounds = array<i64: 16, 32>}, {pipeline_mode = #tpu.pipeline_mode<synchronous>, transform_indices = @transform_1, window_bounds = array<i64: 32, 256>}, {pipeline_mode = #tpu.pipeline_mode<synchronous>, transform_indices = @transform_2, window_bounds = array<i64: 1, 256>}, {pipeline_mode = #tpu.pipeline_mode<synchronous>, transform_indices = @transform_3, window_bounds = array<i64: 1, 128>}, {pipeline_mode = #tpu.pipeline_mode<synchronous>, transform_indices = @transform_4, window_bounds = array<i64: 1, 128>}, {transform_indices = @transform_5, window_bounds = array<i64: 16, 128>}]} {
    %c0 = arith.constant 0 : index
    %c0_0 = arith.constant 0 : index
    %0 = vector.load %arg1[%c0, %c0_0] : memref<16x32xf32, #tpu.memory_space<vmem>>, vector<16x32xf32>
    %c0_1 = arith.constant 0 : index
    %c0_2 = arith.constant 0 : index
    %1 = vector.load %arg2[%c0_1, %c0_2] : memref<32x256xf32, #tpu.memory_space<vmem>>, vector<32x256xf32>
    %cst = arith.constant dense<0.000000e+00> : vector<16x256xf32>
    %2 = tpu.matmul %0, %1, %cst {dimension_numbers = #tpu.dot_dimension_numbers<[1], [0], [0], [1], [0, 0, 1, 1], [], []>} : vector<16x32xf32>, vector<32x256xf32>, vector<16x256xf32> -> vector<16x256xf32>
    %c0_3 = arith.constant 0 : index
    %c0_4 = arith.constant 0 : index
    %3 = vector.load %arg3[%c0_3, %c0_4] : memref<1x256xf32, #tpu.memory_space<vmem>>, vector<1x256xf32>
    %4 = vector.broadcast %3 : vector<1x256xf32> to vector<16x256xf32>
    %5 = arith.addf %2, %4 : vector<16x256xf32>
    %6 = vector.extract_strided_slice %5 {offsets = [0, 0], sizes = [16, 128], strides = [1, 1]} : vector<16x256xf32> to vector<16x128xf32>
    %7 = vector.extract_strided_slice %5 {offsets = [0, 128], sizes = [16, 128], strides = [1, 1]} : vector<16x256xf32> to vector<16x128xf32>
    %cst_5 = arith.constant 5.000000e-01 : f32
    %8 = vector.broadcast %cst_5 : f32 to vector<16x128xf32>
    %9 = arith.mulf %8, %6 : vector<16x128xf32>
    %cst_6 = arith.constant 0.707106769 : f32
    %10 = vector.broadcast %cst_6 : f32 to vector<16x128xf32>
    %11 = arith.mulf %6, %10 : vector<16x128xf32>
    %12 = math.erf %11 : vector<16x128xf32>
    %cst_7 = arith.constant 1.000000e+00 : f32
    %13 = vector.broadcast %cst_7 : f32 to vector<16x128xf32>
    %14 = arith.addf %13, %12 : vector<16x128xf32>
    %15 = arith.mulf %9, %14 : vector<16x128xf32>
    %16 = arith.addf %15, %7 : vector<16x128xf32>
    %cst_8 = arith.constant dense<0.000000e+00> : vector<16xf32>
    %17 = vector.multi_reduction <add>, %16, %cst_8 [1] : vector<16x128xf32> to vector<16xf32>
    %18 = vector.shape_cast %17 : vector<16xf32> to vector<16x1xf32>
    %cst_9 = arith.constant 1.562500e-02 : f32
    %19 = vector.broadcast %cst_9 : f32 to vector<16x1xf32>
    %20 = arith.mulf %18, %19 : vector<16x1xf32>
    %21 = arith.mulf %16, %16 : vector<16x128xf32>
    %cst_10 = arith.constant dense<0.000000e+00> : vector<16xf32>
    %22 = vector.multi_reduction <add>, %21, %cst_10 [1] : vector<16x128xf32> to vector<16xf32>
    %23 = vector.shape_cast %22 : vector<16xf32> to vector<16x1xf32>
    %cst_11 = arith.constant 1.562500e-02 : f32
    %24 = vector.broadcast %cst_11 : f32 to vector<16x1xf32>
    %25 = arith.mulf %23, %24 : vector<16x1xf32>
    %26 = arith.mulf %20, %20 : vector<16x1xf32>
    %27 = arith.subf %25, %26 : vector<16x1xf32>
    %cst_12 = arith.constant 0.000000e+00 : f32
    %28 = vector.broadcast %cst_12 : f32 to vector<16x1xf32>
    %29 = arith.maximumf %27, %28 : vector<16x1xf32>
    %30 = vector.broadcast %20 : vector<16x1xf32> to vector<16x128xf32>
    %31 = arith.subf %16, %30 : vector<16x128xf32>
    %cst_13 = arith.constant 9.99999974E-6 : f32
    %32 = vector.broadcast %cst_13 : f32 to vector<16x1xf32>
    %33 = arith.addf %29, %32 : vector<16x1xf32>
    %34 = math.rsqrt %33 : vector<16x1xf32>
    %35 = vector.broadcast %34 : vector<16x1xf32> to vector<16x128xf32>
    %36 = arith.mulf %31, %35 : vector<16x128xf32>
    %c0_14 = arith.constant 0 : index
    %c0_15 = arith.constant 0 : index
    %37 = vector.load %arg4[%c0_14, %c0_15] : memref<1x128xf32, #tpu.memory_space<vmem>>, vector<1x128xf32>
    %38 = vector.broadcast %37 : vector<1x128xf32> to vector<16x128xf32>
    %39 = arith.mulf %36, %38 : vector<16x128xf32>
    %c0_16 = arith.constant 0 : index
    %c0_17 = arith.constant 0 : index
    %40 = vector.load %arg5[%c0_16, %c0_17] : memref<1x128xf32, #tpu.memory_space<vmem>>, vector<1x128xf32>
    %41 = vector.broadcast %40 : vector<1x128xf32> to vector<16x128xf32>
    %42 = arith.addf %39, %41 : vector<16x128xf32>
    %c0_18 = arith.constant 0 : index
    %c0_19 = arith.constant 0 : index
    %43 = vector.load %arg6[%c0_18, %c0_19] : memref<16x128xf32, #tpu.memory_space<vmem>>, vector<16x128xf32>
    tpu.vector_store %arg6[%c0_18, %c0_19], %42 {strides = array<i32>} : memref<16x128xf32, #tpu.memory_space<vmem>>, vector<16x128xf32>,
    return
  }
  func.func @transform_0(%arg0: i32) -> (i32, i32) {
    %c0_i32 = arith.constant 0 : i32
    %c0_i32_0 = arith.constant 0 : i32
    return %arg0, %c0_i32 : i32, i32
  }
  func.func @transform_1(%arg0: i32) -> (i32, i32) {
    %c0_i32 = arith.constant 0 : i32
    %c0_i32_0 = arith.constant 0 : i32
    %c0_i32_1 = arith.constant 0 : i32
    return %c0_i32, %c0_i32_0 : i32, i32
  }
  func.func @transform_2(%arg0: i32) -> (i32, i32) {
    %c0_i32 = arith.constant 0 : i32
    %c0_i32_0 = arith.constant 0 : i32
    %c0_i32_1 = arith.constant 0 : i32
    return %c0_i32, %c0_i32_0 : i32, i32
  }
  func.func @transform_3(%arg0: i32) -> (i32, i32) {
    %c0_i32 = arith.constant 0 : i32
    %c0_i32_0 = arith.constant 0 : i32
    %c0_i32_1 = arith.constant 0 : i32
    return %c0_i32, %c0_i32_0 : i32, i32
  }
  func.func @transform_4(%arg0: i32) -> (i32, i32) {
    %c0_i32 = arith.constant 0 : i32
    %c0_i32_0 = arith.constant 0 : i32
    %c0_i32_1 = arith.constant 0 : i32
    return %c0_i32, %c0_i32_0 : i32, i32
  }
  func.func @transform_5(%arg0: i32) -> (i32, i32) {
    %c0_i32 = arith.constant 0 : i32
    %c0_i32_0 = arith.constant 0 : i32
    return %arg0, %c0_i32 : i32, i32
  }
}

</mosaic_0001>

<llo_original>
// kernel: _residual_block_impl.1
$region0: #{_residual_block_impl.1}
  #allocation0 [shape = 'u32[]', space=smem, size = 0x4, offset = 0x4, fixed_abs, tag = 'smem constant byte address 0x4 - core index']
  #allocation1 [shape = 'u32[144,128]{1,0:T(1,128)}', space=vmem, size = 0x12000, scoped, tag = 'internal scratch']
  %s0 = inlined_call_operand.hbm [shape: f32[16,32], index: 0, kind: input, shape index: {}]
  %s1 = inlined_call_operand.hbm [shape: f32[32,256], index: 1, kind: input, shape index: {}]
  %s2 = inlined_call_operand.vmem [shape: f32[1,256], index: 2, kind: input, shape index: {}]
  %s3 = inlined_call_operand.vmem [shape: f32[1,128], index: 3, kind: input, shape index: {}]
  %s4 = inlined_call_operand.vmem [shape: f32[1,128], index: 4, kind: input, shape index: {}]
  %s5 = inlined_call_operand.vmem [shape: f32[16,128], index: 5, kind: output, shape index: {}]
  %s6 = sld [smem:[#allocation0]]
  $region38: #{_residual_block_impl.1} parent=0
    _
  %s8 = ssub.s32 1, %s6
  %s9 = scalar_select 0, %s8, %s6
  $region1: #{_residual_block_impl.1} parent=0
    #allocation2 [shape = 'u8[8192]{0}', space=vmem, size = 0x2000, scoped, tag = 'input window, operand 0, single buffered']
    #allocation3 [shape = 's32[1]{0}', space=sflag, size = 0x4, scoped, tag = 'scoped memory for _residual_block_impl.1']
    #allocation4 [shape = 'u8[32768]{0}', space=vmem, size = 0x8000, scoped, tag = 'input window, operand 1, single buffered']
    #allocation5 [shape = 's32[1]{0}', space=sflag, size = 0x4, scoped, tag = 'scoped memory for _residual_block_impl.1']
    %10 = vsyncpa [#allocation3], 0
    %11 = vsyncpa [#allocation5], 0
    // Predicated region
    $region2: #{_residual_block_impl.1} parent=1 // pred_check
      _
    $region3: #{_residual_block_impl.1} parent=1 // pred_check_branch
      %13 = sbr.rel (0) target = $region5
    $region4: #{_residual_block_impl.1} parent=1 // pred_region
      %s15 = ssub.s32 256, 256
      %16 = vsyncadd [#allocation3], %s15
      %s17 = sshll.u32 [#allocation2], 4
      %s18 = int_to_ptr.vmem [resolvable:$true] %s17
      %23 = dma.hbm_to_vmem [thread:$0]  %s0, 256, %s18, [#allocation3], 128, 128, 8
    $region5: #{_residual_block_impl.1} parent=1 // pred_fallthru
      _
    // Predicated region
    $region6: #{_residual_block_impl.1} parent=1 // pred_check
      _
    $region7: #{_residual_block_impl.1} parent=1 // pred_check_branch
      %25 = sbr.rel (0) target = $region9
    $region8: #{_residual_block_impl.1} parent=1 // pred_region
      %s27 = ssub.s32 1024, 1024
      %28 = vsyncadd [#allocation5], %s27
      %s29 = sshll.u32 [#allocation4], 4
      %s30 = int_to_ptr.vmem [resolvable:$true] %s29
      %35 = dma.hbm_to_vmem [thread:$0]  %s1, 1024, %s30, [#allocation5], 256, 256, 16
    $region9: #{_residual_block_impl.1} parent=1 // pred_fallthru
      _
    // Predicated region
    $region10: #{_residual_block_impl.1} parent=1 // pred_check
      _
    $region11: #{_residual_block_impl.1} parent=1 // pred_check_branch
      %37 = sbr.rel (0) target = $region13
    $region12: #{_residual_block_impl.1} parent=1 // pred_region
      _
    $region13: #{_residual_block_impl.1} parent=1 // pred_fallthru
      _
    // Predicated region
    $region14: #{_residual_block_impl.1} parent=1 // pred_check
      _
    $region15: #{_residual_block_impl.1} parent=1 // pred_check_branch
      %39 = sbr.rel (0) target = $region17
    $region16: #{_residual_block_impl.1} parent=1 // pred_region
      _
    $region17: #{_residual_block_impl.1} parent=1 // pred_fallthru
      _
    // Predicated region
    $region18: #{_residual_block_impl.1} parent=1 // pred_check
      _
    $region19: #{_residual_block_impl.1} parent=1 // pred_check_branch
      %41 = sbr.rel (0) target = $region21
    $region20: #{_residual_block_impl.1} parent=1 // pred_region
      _
    $region21: #{_residual_block_impl.1} parent=1 // pred_fallthru
      _
    // Predicated region
    $region22: #{_residual_block_impl.1} parent=1 // pred_check
      _
    $region23: #{_residual_block_impl.1} parent=1 // pred_check_branch
      %43 = sbr.rel (0) target = $region25
    $region24: #{_residual_block_impl.1} parent=1 // pred_region
      %44 = dma.done [#allocation3], 256
    $region25: #{_residual_block_impl.1} parent=1 // pred_fallthru
      _
    // Predicated region
    $region26: #{_residual_block_impl.1} parent=1 // pred_check
      _
    $region27: #{_residual_block_impl.1} parent=1 // pred_check_branch
      %46 = sbr.rel (0) target = $region29
    $region28: #{_residual_block_impl.1} parent=1 // pred_region
      %47 = dma.done [#allocation5], 1024
    $region29: #{_residual_block_impl.1} parent=1 // pred_fallthru
      _
    %v48 = vld [vmem:[#allocation2] sm:$0xff]
    %v49 = vld [vmem:[#allocation2 + $0x8] sm:$0xff]
    %v50 = vld [vmem:[#allocation4] sm:$0xff]
    %v51 = vld [vmem:[#allocation4 + $0x8] sm:$0xff]
    %v52 = vld [vmem:[#allocation4 + $0x10] sm:$0xff]
    %v53 = vld [vmem:[#allocation4 + $0x18] sm:$0xff]
    %v54 = vld [vmem:[#allocation4 + $0x20] sm:$0xff]
    %v55 = vld [vmem:[#allocation4 + $0x28] sm:$0xff]
    %v56 = vld [vmem:[#allocation4 + $0x30] sm:$0xff]
    %v57 = vld [vmem:[#allocation4 + $0x38] sm:$0xff]
    %v58 = vld [vmem:[%s2] sm:$0x3]
    %v60 = vlaneseq
    %v61 = vshrl.u32 %v60, 7
    %v62 = vsub.s32 0, %v61
    %v63 = vrot.slane %v58, %v62
    %v64 = vlaneseq
    %v65 = vshrl.u32 %v64, 7
    %v66 = vsub.s32 1, %v65
    %v67 = vrot.slane %v58, %v66
    %vm70 = vcmask 261120
    %v72 = vsel %vm70, %v48, 0
    %v75 = vsel %vm70, %v49, 0
    %77 = vmatprep.subr.mxu0 0.0
    %78 = vmatpush1.msra.mxu0 0.0
    %79 = vmatprep.subr.mxu0 0.0
    %80 = vmatpush1.msra.mxu0 0.0
    %81 = vmatprep.subr.mxu0 0.0
    %82 = vmatpush1.msra.mxu0 0.0
    %83 = vmatprep.subr.mxu0 0.0
    %84 = vmatpush1.msra.mxu0 0.0
    %85 = vmatprep.subr.mxu0 0.0
    %86 = vmatpush1.msra.mxu0 0.0
    %87 = vmatprep.subr.mxu0 0.0
    %88 = vmatpush1.msra.mxu0 0.0
    %89 = vmatprep.subr.mxu0 0.0
    %90 = vmatpush1.msra.mxu0 0.0
    %91 = vmatprep.subr.mxu0 0.0
    %92 = vmatpush1.msra.mxu0 0.0
    %93 = vmatprep.subr.mxu0 0.0
    %94 = vmatpush1.msra.mxu0 0.0
    %95 = vmatprep.subr.mxu0 0.0
    %96 = vmatpush1.msra.mxu0 0.0
    %97 = vmatprep.subr.mxu0 0.0
    %98 = vmatpush1.msra.mxu0 0.0
    %99 = vmatprep.subr.mxu0 0.0
    %100 = vmatpush1.msra.mxu0 0.0
    %101 = vmatprep.subr.mxu0 %v57
    %102 = vmatpush1.msra.mxu0 %v56
    %103 = vmatprep.subr.mxu0 %v55
    %104 = vmatpush1.msra.mxu0 %v54
    %105 = vmatprep.subr.mxu0 %v53
    %106 = vmatpush1.msra.mxu0 %v52
    %107 = vmatprep.subr.mxu0 %v51
    %108 = vmatpush1.msra.mxu0 %v50
    %109 = vmatprep.subr.mxu0 0.0
    %110 = vmatpush2.msra.mxu0 0.0
    %111 = vmatprep.subr.mxu0 0.0
    %112 = vmatpush2.msra.mxu0 0.0
    %113 = vmatprep.subr.mxu0 0.0
    %114 = vmatpush2.msra.mxu0 0.0
    %115 = vmatprep.subr.mxu0 0.0
    %116 = vmatpush2.msra.mxu0 0.0
    %117 = vmatprep.subr.mxu0 0.0
    %118 = vmatpush2.msra.mxu0 0.0
    %119 = vmatprep.subr.mxu0 0.0
    %120 = vmatpush2.msra.mxu0 0.0
    %121 = vmatprep.subr.mxu0 0.0
    %122 = vmatpush2.msra.mxu0 0.0
    %123 = vmatprep.subr.mxu0 0.0
    %124 = vmatpush2.msra.mxu0 0.0
    %125 = vmatprep.subr.mxu0 0.0
    %126 = vmatpush2.msra.mxu0 0.0
    %127 = vmatprep.subr.mxu0 0.0
    %128 = vmatpush2.msra.mxu0 0.0
    %129 = vmatprep.subr.mxu0 0.0
    %130 = vmatpush2.msra.mxu0 0.0
    %131 = vmatprep.subr.mxu0 0.0
    %132 = vmatpush2.msra.mxu0 0.0
    %133 = vmatprep.subr.mxu0 0.0
    %134 = vmatpush2.msra.mxu0 0.0
    %135 = vmatprep.subr.mxu0 0.0
    %136 = vmatpush2.msra.mxu0 0.0
    %137 = vmatprep.subr.mxu0 0.0
    %138 = vmatpush2.msra.mxu0 0.0
    %139 = vmatprep.subr.mxu0 0.0
    %140 = vmatpush2.msra.mxu0 0.0
    %141 = vmatprep.mubr.f32.mxu0 0.0
    %142 = vmatmul.mubr.f32.gmra.mxu0 %v72
    %v143 = vpop.f32.mrf.mxu0
    %v144 = vadd.f32 %v63, %v143
    %v145 = vpop.f32.mrf.mxu0
    %v146 = vadd.f32 %v67, %v145
    %147 = vmatprep.mubr.f32.mxu0 0.0
    %148 = vmatmul.mubr.f32.gmra.mxu0 %v75
    %v149 = vpop.f32.mrf.mxu0
    %v150 = vadd.f32 %v63, %v149
    %v151 = vpop.f32.mrf.mxu0
    %v152 = vadd.f32 %v67, %v151
    %153 = vdwg.mxu0
    %v154 = vmul.f32 %v144, 0.5
    %v155 = vmul.f32 %v150, 0.5
    %v156 = vmul.f32 %v144, 0.70710677
    %v157 = vmul.f32 %v150, 0.70710677
    %v158 = verf.f32.pop %v156
    %v159 = verf.f32.pop %v157
    %v160 = vadd.f32 %v158, 1.0
    %v161 = vadd.f32 %v159, 1.0
    %v162 = vmul.f32 %v154, %v160
    %v163 = vmul.f32 %v155, %v161
    %v164 = vadd.f32 %v162, %v146
    %v165 = vadd.f32 %v163, %v152
    %166 = vadd.xlane.f32.xlu0 %v164
    %v167 = vpop.xlane.xlu0 %166
    %168 = vadd.xlane.f32.xlu0 %v165
    %v169 = vpop.xlane.xlu0 %168
    %v170 = vmul.f32 %v167, 0.015625
    %v171 = vmul.f32 %v169, 0.015625
    %v172 = vmul.f32 %v164, %v164
    %v173 = vmul.f32 %v165, %v165
    %174 = vadd.xlane.f32.xlu0 %v172
    %v175 = vpop.xlane.xlu0 %174
    %176 = vadd.xlane.f32.xlu0 %v173
    %v177 = vpop.xlane.xlu0 %176
    %v178 = vmul.f32 %v175, 0.015625
    %v179 = vmul.f32 %v177, 0.015625
    %v180 = vmul.f32 %v170, %v170
    %v181 = vmul.f32 %v171, %v171
    %v182 = vsub.f32 %v178, %v180
    %v183 = vsub.f32 %v179, %v181
    %v184 = vmax.f32 %v182, 0.0
    %v185 = vmax.f32 %v183, 0.0
    %v186 = vsub.f32 %v164, %v170
    %v187 = vsub.f32 %v165, %v171
    %v188 = vadd.f32 %v184, 1e-05
    %v189 = vadd.f32 %v185, 1e-05
    %v190 = vrsqrt.pop %v188
    %v191 = vrsqrt.pop %v189
    %v192 = vmul.f32 %v186, %v190
    %v193 = vmul.f32 %v187, %v191
    %v194 = vld [vmem:[%s3] sm:$0x1]
    %v196 = vlaneseq
    %v197 = vshrl.u32 %v196, 7
    %v198 = vsub.s32 0, %v197
    %v199 = vrot.slane %v194, %v198
    %v201 = vmul.f32 %v192, %v199
    %v202 = vmul.f32 %v193, %v199
    %v203 = vld [vmem:[%s4] sm:$0x1]
    %v205 = vlaneseq
    %v206 = vshrl.u32 %v205, 7
    %v207 = vsub.s32 0, %v206
    %v208 = vrot.slane %v203, %v207
    %v210 = vadd.f32 %v201, %v208
    %v211 = vadd.f32 %v202, %v208
    %212 = vst [vmem:[%s5] sm:$0xff] %v210
    %213 = vst [vmem:[%s5 + $0x8] sm:$0xff] %v211
    // Predicated region
    $region30: #{_residual_block_impl.1} parent=1 // pred_check
      _
    $region31: #{_residual_block_impl.1} parent=1 // pred_check_branch
      %215 = sbr.rel (0) target = $region33
    $region32: #{_residual_block_impl.1} parent=1 // pred_region
      _
    $region33: #{_residual_block_impl.1} parent=1 // pred_fallthru
      _
    // Predicated region
    $region34: #{_residual_block_impl.1} parent=1 // pred_check
      _
    $region35: #{_residual_block_impl.1} parent=1 // pred_check_branch
      %217 = sbr.rel (0) target = $region37
    $region36: #{_residual_block_impl.1} parent=1 // pred_region
      _
    $region37: #{_residual_block_impl.1} parent=1 // pred_fallthru
      _
    %218 = vsyncpa [#allocation3], 1
    %219 = vsyncpa [#allocation5], 1

// kernel: _residual_block_impl.1
$region0: #{_residual_block_impl.1}
  #allocation0 [shape = 'u32[]', space=smem, size = 0x4, offset = 0x4, fixed_abs, tag = 'smem constant byte address 0x4 - core index']
  #allocation1 [shape = 'u32[144,128]{1,0:T(1,128)}', space=vmem, size = 0x12000, scoped, tag = 'internal scratch']
  %s0 = inlined_call_operand.hbm [shape: f32[16,32], index: 0, kind: input, shape index: {}]
  %s1 = inlined_call_operand.hbm [shape: f32[32,256], index: 1, kind: input, shape index: {}]
  %s2 = inlined_call_operand.vmem [shape: f32[1,256], index: 2, kind: input, shape index: {}]
  %s3 = inlined_call_operand.vmem [shape: f32[1,128], index: 3, kind: input, shape index: {}]
  %s4 = inlined_call_operand.vmem [shape: f32[1,128], index: 4, kind: input, shape index: {}]
  %s5 = inlined_call_operand.vmem [shape: f32[16,128], index: 5, kind: output, shape index: {}]
  %s6 = sld [smem:[#allocation0]]
  $region38: #{_residual_block_impl.1} parent=0
    _
  %s8 = ssub.s32 1, %s6
  %s9 = scalar_select 0, %s8, %s6
  $region1: #{_residual_block_impl.1} parent=0
    #allocation2 [shape = 'u8[8192]{0}', space=vmem, size = 0x2000, scoped, tag = 'input window, operand 0, single buffered']
    #allocation3 [shape = 's32[1]{0}', space=sflag, size = 0x4, scoped, tag = 'scoped memory for _residual_block_impl.1']
    #allocation4 [shape = 'u8[32768]{0}', space=vmem, size = 0x8000, scoped, tag = 'input window, operand 1, single buffered']
    #allocation5 [shape = 's32[1]{0}', space=sflag, size = 0x4, scoped, tag = 'scoped memory for _residual_block_impl.1']
    %10 = vsyncpa [#allocation3], 0
    %11 = vsyncpa [#allocation5], 0
    // Predicated region
    $region2: #{_residual_block_impl.1} parent=1 // pred_check
      _
    $region3: #{_residual_block_impl.1} parent=1 // pred_check_branch
      %13 = sbr.rel (0) target = $region5
    $region4: #{_residual_block_impl.1} parent=1 // pred_region
      %s15 = ssub.s32 256, 256
      %16 = vsyncadd [#allocation3], %s15
      %s17 = sshll.u32 [#allocation2], 4
      %s18 = int_to_ptr.vmem [resolvable:$true] %s17
      %23 = dma.hbm_to_vmem [thread:$0]  %s0, 256, %s18, [#allocation3], 128, 128, 8
    $region5: #{_residual_block_impl.1} parent=1 // pred_fallthru
      _
    // Predicated region
    $region6: #{_residual_block_impl.1} parent=1 // pred_check
      _
    $region7: #{_residual_block_impl.1} parent=1 // pred_check_branch
      %25 = sbr.rel (0) target = $region9
    $region8: #{_residual_block_impl.1} parent=1 // pred_region
      %s27 = ssub.s32 1024, 1024
      %28 = vsyncadd [#allocation5], %s27
      %s29 = sshll.u32 [#allocation4], 4
      %s30 = int_to_ptr.vmem [resolvable:$true] %s29
      %35 = dma.hbm_to_vmem [thread:$0]  %s1, 1024, %s30, [#allocation5], 256, 256, 16
    $region9: #{_residual_block_impl.1} parent=1 // pred_fallthru
      _
    // Predicated region
    $region10: #{_residual_block_impl.1} parent=1 // pred_check
      _
    $region11: #{_residual_block_impl.1} parent=1 // pred_check_branch
      %37 = sbr.rel (0) target = $region13
    $region12: #{_residual_block_impl.1} parent=1 // pred_region
      _
    $region13: #{_residual_block_impl.1} parent=1 // pred_fallthru
      _
    // Predicated region
    $region14: #{_residual_block_impl.1} parent=1 // pred_check
      _
    $region15: #{_residual_block_impl.1} parent=1 // pred_check_branch
      %39 = sbr.rel (0) target = $region17
    $region16: #{_residual_block_impl.1} parent=1 // pred_region
      _
    $region17: #{_residual_block_impl.1} parent=1 // pred_fallthru
      _
    // Predicated region
    $region18: #{_residual_block_impl.1} parent=1 // pred_check
      _
    $region19: #{_residual_block_impl.1} parent=1 // pred_check_branch
      %41 = sbr.rel (0) target = $region21
    $region20: #{_residual_block_impl.1} parent=1 // pred_region
      _
    $region21: #{_residual_block_impl.1} parent=1 // pred_fallthru
      _
    // Predicated region
    $region22: #{_residual_block_impl.1} parent=1 // pred_check
      _
    $region23: #{_residual_block_impl.1} parent=1 // pred_check_branch
      %43 = sbr.rel (0) target = $region25
    $region24: #{_residual_block_impl.1} parent=1 // pred_region
      %44 = dma.done [#allocation3], 256
    $region25: #{_residual_block_impl.1} parent=1 // pred_fallthru
      _
    // Predicated region
    $region26: #{_residual_block_impl.1} parent=1 // pred_check
      _
    $region27: #{_residual_block_impl.1} parent=1 // pred_check_branch
      %46 = sbr.rel (0) target = $region29
    $region28: #{_residual_block_impl.1} parent=1 // pred_region
      %47 = dma.done [#allocation5], 1024
    $region29: #{_residual_block_impl.1} parent=1 // pred_fallthru
      _
    %v48 = vld [vmem:[#allocation2] sm:$0xff]
    %v49 = vld [vmem:[#allocation2 + $0x8] sm:$0xff]
    %v50 = vld [vmem:[#allocation4] sm:$0xff]
    %v51 = vld [vmem:[#allocation4 + $0x8] sm:$0xff]
    %v52 = vld [vmem:[#allocation4 + $0x10] sm:$0xff]
    %v53 = vld [vmem:[#allocation4 + $0x18] sm:$0xff]
    %v54 = vld [vmem:[#allocation4 + $0x20] sm:$0xff]
    %v55 = vld [vmem:[#allocation4 + $0x28] sm:$0xff]
    %v56 = vld [vmem:[#allocation4 + $0x30] sm:$0xff]
    %v57 = vld [vmem:[#allocation4 + $0x38] sm:$0xff]
    %v58 = vld [vmem:[%s2] sm:$0x3]
    %v60 = vlaneseq
    %v61 = vshrl.u32 %v60, 7
    %v62 = vsub.s32 0, %v61
    %v63 = vrot.slane %v58, %v62
    %v64 = vlaneseq
    %v65 = vshrl.u32 %v64, 7
    %v66 = vsub.s32 1, %v65
    %v67 = vrot.slane %v58, %v66
    %vm70 = vcmask 261120
    %v72 = vsel %vm70, %v48, 0
    %v75 = vsel %vm70, %v49, 0
    %77 = vmatprep.subr.mxu0 0.0
    %78 = vmatpush1.msra.mxu0 0.0
    %79 = vmatprep.subr.mxu0 0.0
    %80 = vmatpush1.msra.mxu0 0.0
    %81 = vmatprep.subr.mxu0 0.0
    %82 = vmatpush1.msra.mxu0 0.0
    %83 = vmatprep.subr.mxu0 0.0
    %84 = vmatpush1.msra.mxu0 0.0
    %85 = vmatprep.subr.mxu0 0.0
    %86 = vmatpush1.msra.mxu0 0.0
    %87 = vmatprep.subr.mxu0 0.0
    %88 = vmatpush1.msra.mxu0 0.0
    %89 = vmatprep.subr.mxu0 0.0
    %90 = vmatpush1.msra.mxu0 0.0
    %91 = vmatprep.subr.mxu0 0.0
    %92 = vmatpush1.msra.mxu0 0.0
    %93 = vmatprep.subr.mxu0 0.0
    %94 = vmatpush1.msra.mxu0 0.0
    %95 = vmatprep.subr.mxu0 0.0
    %96 = vmatpush1.msra.mxu0 0.0
    %97 = vmatprep.subr.mxu0 0.0
    %98 = vmatpush1.msra.mxu0 0.0
    %99 = vmatprep.subr.mxu0 0.0
    %100 = vmatpush1.msra.mxu0 0.0
    %101 = vmatprep.subr.mxu0 %v57
    %102 = vmatpush1.msra.mxu0 %v56
    %103 = vmatprep.subr.mxu0 %v55
    %104 = vmatpush1.msra.mxu0 %v54
    %105 = vmatprep.subr.mxu0 %v53
    %106 = vmatpush1.msra.mxu0 %v52
    %107 = vmatprep.subr.mxu0 %v51
    %108 = vmatpush1.msra.mxu0 %v50
    %109 = vmatprep.subr.mxu0 0.0
    %110 = vmatpush2.msra.mxu0 0.0
    %111 = vmatprep.subr.mxu0 0.0
    %112 = vmatpush2.msra.mxu0 0.0
    %113 = vmatprep.subr.mxu0 0.0
    %114 = vmatpush2.msra.mxu0 0.0
    %115 = vmatprep.subr.mxu0 0.0
    %116 = vmatpush2.msra.mxu0 0.0
    %117 = vmatprep.subr.mxu0 0.0
    %118 = vmatpush2.msra.mxu0 0.0
    %119 = vmatprep.subr.mxu0 0.0
    %120 = vmatpush2.msra.mxu0 0.0
    %121 = vmatprep.subr.mxu0 0.0
    %122 = vmatpush2.msra.mxu0 0.0
    %123 = vmatprep.subr.mxu0 0.0
    %124 = vmatpush2.msra.mxu0 0.0
    %125 = vmatprep.subr.mxu0 0.0
    %126 = vmatpush2.msra.mxu0 0.0
    %127 = vmatprep.subr.mxu0 0.0
    %128 = vmatpush2.msra.mxu0 0.0
    %129 = vmatprep.subr.mxu0 0.0
    %130 = vmatpush2.msra.mxu0 0.0
    %131 = vmatprep.subr.mxu0 0.0
    %132 = vmatpush2.msra.mxu0 0.0
    %133 = vmatprep.subr.mxu0 0.0
    %134 = vmatpush2.msra.mxu0 0.0
    %135 = vmatprep.subr.mxu0 0.0
    %136 = vmatpush2.msra.mxu0 0.0
    %137 = vmatprep.subr.mxu0 0.0
    %138 = vmatpush2.msra.mxu0 0.0
    %139 = vmatprep.subr.mxu0 0.0
    %140 = vmatpush2.msra.mxu0 0.0
    %141 = vmatprep.mubr.f32.mxu0 0.0
    %142 = vmatmul.mubr.f32.gmra.mxu0 %v72
    %v143 = vpop.f32.mrf.mxu0
    %v144 = vadd.f32 %v63, %v143
    %v145 = vpop.f32.mrf.mxu0
    %v146 = vadd.f32 %v67, %v145
    %147 = vmatprep.mubr.f32.mxu0 0.0
    %148 = vmatmul.mubr.f32.gmra.mxu0 %v75
    %v149 = vpop.f32.mrf.mxu0
    %v150 = vadd.f32 %v63, %v149
    %v151 = vpop.f32.mrf.mxu0
    %v152 = vadd.f32 %v67, %v151
    %153 = vdwg.mxu0
    %v154 = vmul.f32 %v144, 0.5
    %v155 = vmul.f32 %v150, 0.5
    %v156 = vmul.f32 %v144, 0.70710677
    %v157 = vmul.f32 %v150, 0.70710677
    %v158 = verf.f32.pop %v156
    %v159 = verf.f32.pop %v157
    %v160 = vadd.f32 %v158, 1.0
    %v161 = vadd.f32 %v159, 1.0
    %v162 = vmul.f32 %v154, %v160
    %v163 = vmul.f32 %v155, %v161
    %v164 = vadd.f32 %v162, %v146
    %v165 = vadd.f32 %v163, %v152
    %166 = vadd.xlane.f32.xlu0 %v164
    %v167 = vpop.xlane.xlu0 %166
    %168 = vadd.xlane.f32.xlu0 %v165
    %v169 = vpop.xlane.xlu0 %168
    %v170 = vmul.f32 %v167, 0.015625
    %v171 = vmul.f32 %v169, 0.015625
    %v172 = vmul.f32 %v164, %v164
    %v173 = vmul.f32 %v165, %v165
    %174 = vadd.xlane.f32.xlu0 %v172
    %v175 = vpop.xlane.xlu0 %174
    %176 = vadd.xlane.f32.xlu0 %v173
    %v177 = vpop.xlane.xlu0 %176
    %v178 = vmul.f32 %v175, 0.015625
    %v179 = vmul.f32 %v177, 0.015625
    %v180 = vmul.f32 %v170, %v170
    %v181 = vmul.f32 %v171, %v171
    %v182 = vsub.f32 %v178, %v180
    %v183 = vsub.f32 %v179, %v181
    %v184 = vmax.f32 %v182, 0.0
    %v185 = vmax.f32 %v183, 0.0
    %v186 = vsub.f32 %v164, %v170
    %v187 = vsub.f32 %v165, %v171
    %v188 = vadd.f32 %v184, 1e-05
    %v189 = vadd.f32 %v185, 1e-05
    %v190 = vrsqrt.pop %v188
    %v191 = vrsqrt.pop %v189
    %v192 = vmul.f32 %v186, %v190
    %v193 = vmul.f32 %v187, %v191
    %v194 = vld [vmem:[%s3] sm:$0x1]
    %v196 = vlaneseq
    %v197 = vshrl.u32 %v196, 7
    %v198 = vsub.s32 0, %v197
    %v199 = vrot.slane %v194, %v198
    %v201 = vmul.f32 %v192, %v199
    %v202 = vmul.f32 %v193, %v199
    %v203 = vld [vmem:[%s4] sm:$0x1]
    %v205 = vlaneseq
    %v206 = vshrl.u32 %v205, 7
    %v207 = vsub.s32 0, %v206
    %v208 = vrot.slane %v203, %v207
    %v210 = vadd.f32 %v201, %v208
    %v211 = vadd.f32 %v202, %v208
    %212 = vst [vmem:[%s5] sm:$0xff] %v210
    %213 = vst [vmem:[%s5 + $0x8] sm:$0xff] %v211
    // Predicated region
    $region30: #{_residual_block_impl.1} parent=1 // pred_check
      _
    $region31: #{_residual_block_impl.1} parent=1 // pred_check_branch
      %215 = sbr.rel (0) target = $region33
    $region32: #{_residual_block_impl.1} parent=1 // pred_region
      _
    $region33: #{_residual_block_impl.1} parent=1 // pred_fallthru
      _
    // Predicated region
    $region34: #{_residual_block_impl.1} parent=1 // pred_check
      _
    $region35: #{_residual_block_impl.1} parent=1 // pred_check_branch
      %217 = sbr.rel (0) target = $region37
    $region36: #{_residual_block_impl.1} parent=1 // pred_region
      _
    $region37: #{_residual_block_impl.1} parent=1 // pred_fallthru
      _
    %218 = vsyncpa [#allocation3], 1
    %219 = vsyncpa [#allocation5], 1

</llo_original>
